<compile_context>
chip_gen: v5e
topology: v5e:2x2
jax: 0.10.0
libtpu: 0.0.40
codegen_flags: <defaults>
</compile_context>

<pallas_src>
import math

import jax
import jax.numpy as jnp
import numpy as np
from jax.experimental import pallas as pl
from jax.experimental.pallas import tpu as pltpu

_INV_SQRT2 = 1.0 / math.sqrt(2.0)


# ----------------------------------------------------------------------------
# Per-generation sizing (v5e/v6e: 128 MiB VMEM, 1 TC; v7x: 64 MiB VMEM, 2 TCs)
# ----------------------------------------------------------------------------
def _tpu_vmem_capacity_bytes():
    try:
        info = pltpu.get_tpu_info()
        for name in ("vmem_capacity_bytes", "vmem_bytes", "vmem_capacity"):
            v = getattr(info, name, None)
            if v:
                return int(v)
    except Exception:
        pass
    return 64 * 1024 * 1024  # conservative fallback (v7x per-core figure)


_VMEM_CAP = _tpu_vmem_capacity_bytes()
# never request the whole physical VMEM; leave double-buffer / compiler scratch headroom
_VMEM_LIMIT = max(32 * 1024 * 1024, _VMEM_CAP - 16 * 1024 * 1024)
# bigger M tiles on 128 MiB parts (amortize per-step overhead), <=1024 on v7x
_MAX_TILE_M = 2048 if _VMEM_CAP >= 96 * 1024 * 1024 else 1024


def _choose_tile_m(M):
    """Full-array block when small; otherwise >=2 tiles (megacore) capped by _MAX_TILE_M."""
    if M <= 256:
        return M                      # full block: legal even if not 8-divisible
    half = -(-M // 2)                 # ceil(M / 2) -> at least two tiles
    half = -(-half // 8) * 8          # round up to a sublane multiple
    return min(_MAX_TILE_M, half)


# ----------------------------------------------------------------------------
# Pallas kernels
# ----------------------------------------------------------------------------
def _joint_kernel(p_ref, e_ref, wc_ref, wg_ref, b_ref, o_ref):
    """joint = patches @ w_conv + emb @ w_embgen + (b_conv + b_embgen)   (one fused pass)."""
    acc = jnp.dot(p_ref[...], wc_ref[...], preferred_element_type=jnp.float32)
    acc = acc + jnp.dot(e_ref[...], wg_ref[...], preferred_element_type=jnp.float32)
    o_ref[...] = (acc + b_ref[...]).astype(o_ref.dtype)


def _prompt_kernel(joint_ref, wlw_ref, blw_ref, ws_ref, bs_ref, o_ref):
    """Per (M-tile, depth): h = GELU(joint @ w_lw[d] + b_lw[d]); out = h @ w_shared + b_shared."""
    d = pl.program_id(1)
    h = (jnp.dot(joint_ref[...], wlw_ref[d], preferred_element_type=jnp.float32)
         + blw_ref[d])
    # exact (erf-based) GELU -- matches torch.nn.GELU() default
    h = 0.5 * h * (1.0 + jax.lax.erf(h * _INV_SQRT2))
    o_ref[...] = (
        jnp.dot(h.astype(ws_ref.dtype), ws_ref[...], preferred_element_type=jnp.float32)
        + bs_ref[...]
    ).astype(o_ref.dtype)


# ----------------------------------------------------------------------------
# Pallas wrappers
# ----------------------------------------------------------------------------
def joint_pallas(patches, emb, w_conv, w_embgen, b_joint, out_dtype=jnp.bfloat16):
    """patches: (M, Kp) bf16; emb: (M, E) bf16; w_conv: (Kp, hid) bf16; w_embgen: (E, hid) bf16;
    b_joint: (1, hid) f32  ->  joint (M, hid) bf16."""
    M, Kp = patches.shape
    Me, E = emb.shape
    assert Me == M
    hid = w_conv.shape[1]
    tm = _choose_tile_m(M)
    return pl.pallas_call(
        _joint_kernel,
        out_shape=jax.ShapeDtypeStruct((M, hid), out_dtype),
        grid=(pl.cdiv(M, tm),),
        in_specs=[
            pl.BlockSpec((tm, Kp), lambda i: (i, 0)),
            pl.BlockSpec((tm, E), lambda i: (i, 0)),
            pl.BlockSpec((Kp, hid), lambda i: (0, 0)),   # resident
            pl.BlockSpec((E, hid), lambda i: (0, 0)),    # resident
            pl.BlockSpec((1, hid), lambda i: (0, 0)),    # resident
        ],
        out_specs=pl.BlockSpec((tm, hid), lambda i: (i, 0)),
        compiler_params=pltpu.CompilerParams(
            dimension_semantics=("parallel",),
            vmem_limit_bytes=_VMEM_LIMIT,
        ),
    )(patches, emb, w_conv, w_embgen, b_joint)


def prompt_pallas(joint, w_lw, b_lw, w_shared, b_shared, out_dtype=jnp.bfloat16):
    """joint: (M, hid) bf16; w_lw: (depth, hid, hid) bf16; b_lw: (depth, 1, hid) f32;
    w_shared: (hid, E) bf16; b_shared: (1, E) f32  ->  (depth, M, E) bf16."""
    M, hid = joint.shape
    depth = w_lw.shape[0]
    E = w_shared.shape[1]
    tm = _choose_tile_m(M)
    return pl.pallas_call(
        _prompt_kernel,
        out_shape=jax.ShapeDtypeStruct((depth, M, E), out_dtype),
        grid=(pl.cdiv(M, tm), depth),                    # depth innermost: joint DMA'd once/M-tile
        in_specs=[
            pl.BlockSpec((tm, hid), lambda m, d: (m, 0)),            # resident across depth
            pl.BlockSpec((depth, hid, hid), lambda m, d: (0, 0, 0)),  # full stack VMEM-resident
            pl.BlockSpec((depth, 1, hid), lambda m, d: (0, 0, 0)),    # full stack VMEM-resident
            pl.BlockSpec((hid, E), lambda m, d: (0, 0)),              # resident
            pl.BlockSpec((1, E), lambda m, d: (0, 0)),                # resident
        ],
        out_specs=pl.BlockSpec((None, tm, E), lambda m, d: (d, m, 0)),
        compiler_params=pltpu.CompilerParams(
            # both axes write disjoint blocks -> megacore can shard either (v7x)
            dimension_semantics=("parallel", "parallel"),
            vmem_limit_bytes=_VMEM_LIMIT,
        ),
    )(joint, w_lw, b_lw, w_shared, b_shared)


# ----------------------------------------------------------------------------
# Glue (plain JAX): FFT high-pass filter and patch extraction
# ----------------------------------------------------------------------------
def fft_filter_reference(x, rate):
    """Exact port of PromptGenerator.fft (complex fft2 + centered box mask + .real + abs).
    (torch shifts all dims, but the mask is uniform over B,C so shifting only H,W is identical.)"""
    B, C, H, W = x.shape
    line = int((H * W * rate) ** 0.5 // 2)
    mask = jnp.zeros((1, 1, H, W), dtype=x.dtype)
    mask = mask.at[:, :, H // 2 - line: H // 2 + line,
                   W // 2 - line: W // 2 + line].set(1.0)
    f = jnp.fft.fftshift(jnp.fft.fft2(x, norm="forward"), axes=(-2, -1))
    f = f * (1.0 - mask)
    f = jnp.fft.ifftshift(f, axes=(-2, -1))
    inv = jnp.fft.ifft2(f, norm="forward").real
    return jnp.abs(inv)


def fft_filter_rfft(x, rate):
    """Real-FFT equivalent of fft_filter_reference:
    Re(ifft2(X * S)) == ifft2(X * sym(S)) for real x and real S (sym(S)(f) = (S(f)+S(-f))/2),
    so irfft2(rfft2(x) * sym(S)_half) reproduces torch's result exactly at ~half the work."""
    B, C, H, W = x.shape
    line = int((H * W * rate) ** 0.5 // 2)
    fy, fx = np.arange(H), np.arange(W)
    sy = ((fy + H // 2) % H) - H // 2         # signed frequency (== fftshift position - N//2)
    sx = ((fx + W // 2) % W) - W // 2
    box = (((sy >= -line) & (sy <= line - 1)).astype(np.float32)[:, None]
           * ((sx >= -line) & (sx <= line - 1)).astype(np.float32)[None, :])
    box_sym = 0.5 * (box + box[(-fy) % H][:, (-fx) % W])
    keep = jnp.asarray((1.0 - box_sym)[:, : W // 2 + 1], jnp.float32)  # half spectrum
    f = jnp.fft.rfft2(x, norm="forward")
    inv = jnp.fft.irfft2(f * keep, s=(H, W), norm="forward")
    return jnp.abs(inv)


def patchify(x, ps):
    """NCHW image -> rows of flattened patches, column order (Cin, kh, kw) matching the
    PyTorch Conv2d weight layout. Row order: (b, i, j) row-major."""
    # TODO(synk): the patch-window gather stays in XLA -- pulling (C, ps, ps) windows directly
    # via BlockSpec is blocked by the (8,128) tiling rule for ps < 128.
    B, C, H, W = x.shape
    nH, nW = H // ps, W // ps
    x = x.reshape(B, C, nH, ps, nW, ps)
    x = x.transpose(0, 2, 4, 1, 3, 5)          # (B, nH, nW, C, ps, ps)
    return x.reshape(B * nH * nW, C * ps * ps), (B, nH * nW)


# ----------------------------------------------------------------------------
# PromptGenerator (Pallas-backed)
# ----------------------------------------------------------------------------
class PromptGeneratorPallas:
    def __init__(self, scale_factor, embed_dim, depth, freq_nums,
                 img_size, patch_size, key):
        self.scale_factor = scale_factor
        self.embed_dim = embed_dim
        self.depth = depth
        self.freq_nums = freq_nums
        self.img_size = img_size
        self.patch_size = patch_size
        hid = embed_dim // scale_factor
        self.hidden = hid

        ks = jax.random.split(key, 3 + depth)

        def trunc_normal(k, shape, std=0.02):
            return jnp.clip(std * jax.random.normal(k, shape, jnp.float32), -2.0, 2.0)

        # ---- reference (f32) parameters (nn.Linear stores (out,in); we store (in,out)) ----
        self.w_shared = trunc_normal(ks[0], (hid, embed_dim))     # Linear(hid -> embed_dim)
        self.b_shared = jnp.zeros((embed_dim,), jnp.float32)
        self.w_embgen = trunc_normal(ks[1], (embed_dim, hid))     # Linear(embed_dim -> hid)
        self.b_embgen = jnp.zeros((hid,), jnp.float32)
        self.w_lw = [trunc_normal(ks[2 + i], (hid, hid)) for i in range(depth)]
        self.b_lw = [jnp.zeros((hid,), jnp.float32) for _ in range(depth)]
        fan_out = patch_size * patch_size * hid
        w_conv = math.sqrt(2.0 / fan_out) * jax.random.normal(
            ks[2 + depth], (hid, 3, patch_size, patch_size), jnp.float32)
        self.w_conv = w_conv.reshape(hid, -1).T                   # (3*ps*ps, hid)
        self.b_conv = jnp.zeros((hid,), jnp.float32)

        # ---- kernel-side parameters: bf16 MXU weights, f32 biases, pre-stacked, NO padding ----
        self.k_w_conv = self.w_conv.astype(jnp.bfloat16)                    # (3*ps*ps, hid)
        self.k_w_embgen = self.w_embgen.astype(jnp.bfloat16)                # (E, hid)
        self.k_b_joint = (self.b_conv + self.b_embgen).reshape(1, hid)      # fused bias, f32
        self.k_w_lw = jnp.stack(self.w_lw).astype(jnp.bfloat16)             # (depth, hid, hid)
        self.k_b_lw = jnp.stack([b.reshape(1, hid) for b in self.b_lw])     # (depth, 1, hid) f32
        self.k_w_shared = self.w_shared.astype(jnp.bfloat16)                # (hid, E)
        self.k_b_shared = self.b_shared.reshape(1, embed_dim)               # (1, E) f32

    def __call__(self, x_img, x_emb):
        # init_handcrafted: fft high-pass + patch extraction (XLA glue, bf16 patches)
        x = fft_filter_rfft(x_img, self.freq_nums).astype(jnp.bfloat16)
        patches, (B, HW) = patchify(x, self.patch_size)
        # init_embeddings input flattening (row order matches the patch order)
        Be, He, We, E = x_emb.shape
        assert Be == B and He * We == HW and E == self.embed_dim
        emb = x_emb.reshape(B * HW, E).astype(jnp.bfloat16)
        # fused: patch-embed matmul + embedding_generator + joint add  (one pallas_call)
        joint = joint_pallas(patches, emb, self.k_w_conv, self.k_w_embgen, self.k_b_joint)
        # fused depth loop: lightweight MLP + GELU + shared MLP  (one pallas_call)
        out = prompt_pallas(joint, self.k_w_lw, self.k_b_lw,
                            self.k_w_shared, self.k_b_shared)     # (depth, M, E) bf16
        # stacked prompts; the torch module returns these as a per-depth python list
        return out.reshape(self.depth, B, HW, self.embed_dim)


# ----------------------------------------------------------------------------
# Pure-JAX reference (correctness check; full f32, exact torch fft formulation)
# ----------------------------------------------------------------------------
def reference_forward(m, x_img, x_emb):
    x = fft_filter_reference(x_img, m.freq_nums)
    patches, (B, HW) = patchify(x, m.patch_size)
    hand = (patches @ m.w_conv + m.b_conv).reshape(B, HW, m.hidden)
    Be, He, We, E = x_emb.shape
    emb = x_emb.reshape(Be, He * We, E) @ m.w_embgen + m.b_embgen
    joint = hand + emb
    outs = []
    for i in range(m.depth):
        h = joint @ m.w_lw[i] + m.b_lw[i]
        h = 0.5 * h * (1.0 + jax.lax.erf(h * _INV_SQRT2))
        outs.append(h @ m.w_shared + m.b_shared)
    return outs


# ----------------------------------------------------------------------------
if __name__ == "__main__":
    key = jax.random.PRNGKey(0)
    k_param, k_img, k_emb = jax.random.split(key, 3)

    # small config
    scale_factor = 4
    embed_dim = 64
    depth = 2
    freq_nums = 0.25
    img_size = 16
    patch_size = 4          # -> 4x4 = 16 patches per image

    model = PromptGeneratorPallas(scale_factor, embed_dim, depth, freq_nums,
                                  img_size, patch_size, k_param)

    B = 2
    x_img = jax.random.normal(k_img, (B, 3, img_size, img_size), jnp.float32)  # NCHW
    # embedding feature map: spatial matches the patch grid (4x4), channels = embed_dim
    x_emb = jax.random.normal(k_emb, (B, 4, 4, embed_dim), jnp.float32)        # NHWC

    prompts = model(x_img, x_emb)               # (depth, B, HW, embed_dim) bf16
    prompts = jax.block_until_ready(prompts)
    assert prompts.shape == (depth, B, 16, embed_dim)

    refs = reference_forward(model, x_img, x_emb)
    for i in range(depth):
        got = np.asarray(prompts[i].astype(jnp.float32))
        ref = np.asarray(refs[i])
        # bf16 MXU operands / bf16 joint + output storage (f32 accumulation) -> relaxed tol
        np.testing.assert_allclose(got, ref, rtol=2e-2, atol=5e-3)

    print("KERNEL_OK")
</pallas_src>

<mosaic_0001>
module attributes {stable_mosaic.version = 11 : i64} {
  func.func @_joint_kernel(%arg0: i32, %arg1: memref<32x48xbf16, #tpu.memory_space<vmem>>, %arg2: memref<32x64xbf16, #tpu.memory_space<vmem>>, %arg3: memref<48x16xbf16, #tpu.memory_space<vmem>>, %arg4: memref<64x16xbf16, #tpu.memory_space<vmem>>, %arg5: memref<1x16xf32, #tpu.memory_space<vmem>>, %arg6: memref<32x16xbf16, #tpu.memory_space<vmem>>) attributes {dimension_semantics = [#tpu.dimension_semantics<parallel>], iteration_bounds = array<i64: 1>, scalar_prefetch = 0 : i64, scratch_operands = 0 : i64, tpu.core_type = #tpu.core_type<tc>, window_params = [{transform_indices = @transform_0, window_bounds = array<i64: 32, 48>}, {transform_indices = @transform_1, window_bounds = array<i64: 32, 64>}, {pipeline_mode = #tpu.pipeline_mode<synchronous>, transform_indices = @transform_2, window_bounds = array<i64: 48, 16>}, {pipeline_mode = #tpu.pipeline_mode<synchronous>, transform_indices = @transform_3, window_bounds = array<i64: 64, 16>}, {pipeline_mode = #tpu.pipeline_mode<synchronous>, transform_indices = @transform_4, window_bounds = array<i64: 1, 16>}, {transform_indices = @transform_5, window_bounds = array<i64: 32, 16>}]} {
    %c0 = arith.constant 0 : index
    %c0_0 = arith.constant 0 : index
    %0 = vector.load %arg1[%c0, %c0_0] : memref<32x48xbf16, #tpu.memory_space<vmem>>, vector<32x48xbf16>
    %c0_1 = arith.constant 0 : index
    %c0_2 = arith.constant 0 : index
    %1 = vector.load %arg3[%c0_1, %c0_2] : memref<48x16xbf16, #tpu.memory_space<vmem>>, vector<48x16xbf16>
    %cst = arith.constant dense<0.000000e+00> : vector<32x16xf32>
    %2 = tpu.matmul %0, %1, %cst {dimension_numbers = #tpu.dot_dimension_numbers<[1], [0], [0], [1], [0, 0, 1, 1], [], []>} : vector<32x48xbf16>, vector<48x16xbf16>, vector<32x16xf32> -> vector<32x16xf32>
    %c0_3 = arith.constant 0 : index
    %c0_4 = arith.constant 0 : index
    %3 = vector.load %arg2[%c0_3, %c0_4] : memref<32x64xbf16, #tpu.memory_space<vmem>>, vector<32x64xbf16>
    %c0_5 = arith.constant 0 : index
    %c0_6 = arith.constant 0 : index
    %4 = vector.load %arg4[%c0_5, %c0_6] : memref<64x16xbf16, #tpu.memory_space<vmem>>, vector<64x16xbf16>
    %cst_7 = arith.constant dense<0.000000e+00> : vector<32x16xf32>
    %5 = tpu.matmul %3, %4, %cst_7 {dimension_numbers = #tpu.dot_dimension_numbers<[1], [0], [0], [1], [0, 0, 1, 1], [], []>} : vector<32x64xbf16>, vector<64x16xbf16>, vector<32x16xf32> -> vector<32x16xf32>
    %6 = arith.addf %2, %5 : vector<32x16xf32>
    %c0_8 = arith.constant 0 : index
    %c0_9 = arith.constant 0 : index
    %7 = vector.load %arg5[%c0_8, %c0_9] : memref<1x16xf32, #tpu.memory_space<vmem>>, vector<1x16xf32>
    %8 = vector.broadcast %7 : vector<1x16xf32> to vector<32x16xf32>
    %9 = arith.addf %6, %8 : vector<32x16xf32>
    %10 = arith.truncf %9 : vector<32x16xf32> to vector<32x16xbf16>
    %c0_10 = arith.constant 0 : index
    %c0_11 = arith.constant 0 : index
    %11 = vector.load %arg6[%c0_10, %c0_11] : memref<32x16xbf16, #tpu.memory_space<vmem>>, vector<32x16xbf16>
    tpu.vector_store %arg6[%c0_10, %c0_11], %10 {strides = array<i32>} : memref<32x16xbf16, #tpu.memory_space<vmem>>, vector<32x16xbf16>,
    return
  }
  func.func @transform_0(%arg0: i32) -> (i32, i32) {
    %c0_i32 = arith.constant 0 : i32
    %c0_i32_0 = arith.constant 0 : i32
    return %arg0, %c0_i32 : i32, i32
  }
  func.func @transform_1(%arg0: i32) -> (i32, i32) {
    %c0_i32 = arith.constant 0 : i32
    %c0_i32_0 = arith.constant 0 : i32
    return %arg0, %c0_i32 : i32, i32
  }
  func.func @transform_2(%arg0: i32) -> (i32, i32) {
    %c0_i32 = arith.constant 0 : i32
    %c0_i32_0 = arith.constant 0 : i32
    %c0_i32_1 = arith.constant 0 : i32
    return %c0_i32, %c0_i32_0 : i32, i32
  }
  func.func @transform_3(%arg0: i32) -> (i32, i32) {
    %c0_i32 = arith.constant 0 : i32
    %c0_i32_0 = arith.constant 0 : i32
    %c0_i32_1 = arith.constant 0 : i32
    return %c0_i32, %c0_i32_0 : i32, i32
  }
  func.func @transform_4(%arg0: i32) -> (i32, i32) {
    %c0_i32 = arith.constant 0 : i32
    %c0_i32_0 = arith.constant 0 : i32
    %c0_i32_1 = arith.constant 0 : i32
    return %c0_i32, %c0_i32_0 : i32, i32
  }
  func.func @transform_5(%arg0: i32) -> (i32, i32) {
    %c0_i32 = arith.constant 0 : i32
    %c0_i32_0 = arith.constant 0 : i32
    return %arg0, %c0_i32 : i32, i32
  }
}

</mosaic_0001>

<llo_original>
// kernel: tpu_custom_call.1
$region0: #{tpu_custom_call.1}
  #allocation0 [shape = 'u32[]', space=smem, size = 0x4, offset = 0x4, fixed_abs, tag = 'smem constant byte address 0x4 - core index']
  #allocation1 [shape = 'u32[72,128]{1,0:T(1,128)}', space=vmem, size = 0x9000, scoped, tag = 'internal scratch']
  %s0 = inlined_call_operand.vmem [shape: bf16[32,48], index: 0, kind: input, shape index: {}]
  %s1 = inlined_call_operand.vmem [shape: bf16[32,64], index: 1, kind: input, shape index: {}]
  %s2 = inlined_call_operand.vmem [shape: bf16[48,16], index: 2, kind: input, shape index: {}]
  %s3 = inlined_call_operand.vmem [shape: bf16[64,16], index: 3, kind: input, shape index: {}]
  %s4 = inlined_call_operand.vmem [shape: f32[1,16], index: 4, kind: input, shape index: {}]
  %s5 = inlined_call_operand.vmem [shape: bf16[32,16], index: 5, kind: output, shape index: {}]
  %s6 = sld [smem:[#allocation0]]
  $region30: #{tpu_custom_call.1} parent=0
    _
  %s8 = ssub.s32 1, %s6
  %s9 = scalar_select 0, %s8, %s6
  // Predicated region
  $region2: #{tpu_custom_call.1} parent=0 // pred_check
    _
  $region3: #{tpu_custom_call.1} parent=0 // pred_check_branch
    %11 = sbr.rel (0) target = $region5
  $region4: #{tpu_custom_call.1} parent=0 // pred_region
    _
  $region5: #{tpu_custom_call.1} parent=0 // pred_fallthru
    _
  // Predicated region
  $region6: #{tpu_custom_call.1} parent=0 // pred_check
    _
  $region7: #{tpu_custom_call.1} parent=0 // pred_check_branch
    %13 = sbr.rel (0) target = $region9
  $region8: #{tpu_custom_call.1} parent=0 // pred_region
    _
  $region9: #{tpu_custom_call.1} parent=0 // pred_fallthru
    _
  // Predicated region
  $region10: #{tpu_custom_call.1} parent=0 // pred_check
    _
  $region11: #{tpu_custom_call.1} parent=0 // pred_check_branch
    %15 = sbr.rel (0) target = $region13
  $region12: #{tpu_custom_call.1} parent=0 // pred_region
    _
  $region13: #{tpu_custom_call.1} parent=0 // pred_fallthru
    _
  // Predicated region
  $region14: #{tpu_custom_call.1} parent=0 // pred_check
    _
  $region15: #{tpu_custom_call.1} parent=0 // pred_check_branch
    %17 = sbr.rel (0) target = $region17
  $region16: #{tpu_custom_call.1} parent=0 // pred_region
    _
  $region17: #{tpu_custom_call.1} parent=0 // pred_fallthru
    _
  // Predicated region
  $region18: #{tpu_custom_call.1} parent=0 // pred_check
    _
  $region19: #{tpu_custom_call.1} parent=0 // pred_check_branch
    %19 = sbr.rel (0) target = $region21
  $region20: #{tpu_custom_call.1} parent=0 // pred_region
    _
  $region21: #{tpu_custom_call.1} parent=0 // pred_fallthru
    _
  %v21 = vld [vmem:[%s0] sm:$0xf]
  %v22 = vld [vmem:[%s0 + $0x4] sm:$0xf]
  %v23 = vld [vmem:[%s0 + $0x8] sm:$0xf]
  %v24 = vld [vmem:[%s0 + $0xc] sm:$0xf]
  %v25 = vld [vmem:[%s2] sm:$0xf]
  %v26 = vld [vmem:[%s2 + $0x4] sm:$0xf]
  %v27 = vld [vmem:[%s2 + $0x8] sm:$0xf]
  %v28 = vld [vmem:[%s2 + $0xc] sm:$0xf]
  %v29 = vld [vmem:[%s2 + $0x10] sm:$0xf]
  %v30 = vld [vmem:[%s2 + $0x14] sm:$0xf]
  %v31 = vld [vmem:[%s1] sm:$0xf]
  %v32 = vld [vmem:[%s1 + $0x4] sm:$0xf]
  %v33 = vld [vmem:[%s1 + $0x8] sm:$0xf]
  %v34 = vld [vmem:[%s1 + $0xc] sm:$0xf]
  %v35 = vld [vmem:[%s3] sm:$0xf]
  %v36 = vld [vmem:[%s3 + $0x4] sm:$0xf]
  %v37 = vld [vmem:[%s3 + $0x8] sm:$0xf]
  %v38 = vld [vmem:[%s3 + $0xc] sm:$0xf]
  %v39 = vld [vmem:[%s3 + $0x10] sm:$0xf]
  %v40 = vld [vmem:[%s3 + $0x14] sm:$0xf]
  %v41 = vld [vmem:[%s3 + $0x18] sm:$0xf]
  %v42 = vld [vmem:[%s3 + $0x1c] sm:$0xf]
  %v47 = vunpack.c.l.b16 %v31
  %v48 = vunpack.c.l.b16 %v32
  %v49 = vunpack.c.l.b16 %v33
  %v50 = vunpack.c.l.b16 %v34
  %v51 = vpack.c.b16 %v48, %v47
  %v52 = vpack.c.b16 %v50, %v49
  %v61 = vunpack.c.l.b16 %v35
  %v62 = vunpack.c.l.b16 %v36
  %v63 = vunpack.c.l.b16 %v37
  %v64 = vunpack.c.l.b16 %v38
  %v65 = vunpack.c.l.b16 %v39
  %v66 = vunpack.c.l.b16 %v40
  %v67 = vunpack.c.l.b16 %v41
  %v68 = vunpack.c.l.b16 %v42
  %v69 = vpack.c.b16 %v62, %v61
  %v70 = vpack.c.b16 %v64, %v63
  %v71 = vpack.c.b16 %v66, %v65
  %v72 = vpack.c.b16 %v68, %v67
  %vm77 = vcmask 523264
  %v79 = vsel %vm77, %v51, 0
  %v82 = vsel %vm77, %v52, 0
  %84 = vmatpush.bf16.msra.mxu0 0
  %85 = vmatpush.bf16.msra.mxu0 0
  %86 = vmatpush.bf16.msra.mxu0 0
  %87 = vmatpush.bf16.msra.mxu0 0
  %88 = vmatpush.bf16.msra.mxu0 %v72
  %89 = vmatpush.bf16.msra.mxu0 %v71
  %90 = vmatpush.bf16.msra.mxu0 %v70
  %91 = vmatpush.bf16.msra.mxu0 %v69
  %92 = vmatmul.bf16.gmra.mxu0 %v79
  %v93 = vpop.f32.mrf.mxu0
  %v94 = vadd.f32 0.0, %v93
  %v95 = vpop.f32.mrf.mxu0
  %v96 = vadd.f32 0.0, %v95
  %97 = vmatmul.bf16.gmra.mxu0 %v82
  %v98 = vpop.f32.mrf.mxu0
  %v99 = vadd.f32 0.0, %v98
  %v100 = vpop.f32.mrf.mxu0
  %v101 = vadd.f32 0.0, %v100
  %102 = vdwg.mxu0
  %v107 = vunpack.c.l.b16 %v21
  %v108 = vunpack.c.l.b16 %v22
  %v109 = vunpack.c.l.b16 %v23
  %v110 = vunpack.c.l.b16 %v24
  %v111 = vpack.c.b16 %v108, %v107
  %v112 = vpack.c.b16 %v110, %v109
  %v119 = vunpack.c.l.b16 %v25
  %v120 = vunpack.c.l.b16 %v26
  %v121 = vunpack.c.l.b16 %v27
  %v122 = vunpack.c.l.b16 %v28
  %v123 = vunpack.c.l.b16 %v29
  %v124 = vunpack.c.l.b16 %v30
  %v125 = vpack.c.b16 %v120, %v119
  %v126 = vpack.c.b16 %v122, %v121
  %v127 = vpack.c.b16 %v124, %v123
  %vm131 = vcmask 392192
  %v133 = vsel %vm131, %v111, 0
  %v136 = vsel %vm131, %v112, 0
  %138 = vmatpush.bf16.msra.mxu0 0
  %139 = vmatpush.bf16.msra.mxu0 0
  %140 = vmatpush.bf16.msra.mxu0 0
  %141 = vmatpush.bf16.msra.mxu0 0
  %142 = vmatpush.bf16.msra.mxu0 0
  %143 = vmatpush.bf16.msra.mxu0 %v127
  %144 = vmatpush.bf16.msra.mxu0 %v126
  %145 = vmatpush.bf16.msra.mxu0 %v125
  %146 = vmatmul.bf16.gmra.mxu0 %v133
  %v147 = vpop.f32.mrf.mxu0
  %v148 = vadd.f32 %v94, %v147
  %v149 = vpop.f32.mrf.mxu0
  %v150 = vadd.f32 %v96, %v149
  %151 = vmatmul.bf16.gmra.mxu0 %v136
  %v152 = vpop.f32.mrf.mxu0
  %v153 = vadd.f32 %v99, %v152
  %v154 = vpop.f32.mrf.mxu0
  %v155 = vadd.f32 %v101, %v154
  %156 = vdwg.mxu0
  %v157 = vld [vmem:[%s4] sm:$0x1]
  %v159 = vperm.slane %v157, 0
  %v161 = vadd.f32 %v148, %v159
  %v162 = vadd.f32 %v150, %v159
  %v163 = vadd.f32 %v153, %v159
  %v164 = vadd.f32 %v155, %v159
  %v165 = vpack.c.bf16 %v161, %v161
  %v166 = vpack.c.bf16 %v162, %v162
  %v167 = vpack.c.bf16 %v163, %v163
  %v168 = vpack.c.bf16 %v164, %v164
  %vm169 = vcmask 125952
  %170 = vst.msk [vmem:[%s5] sm:$0xf] %vm169, %v165
  %171 = vst.msk [vmem:[%s5 + $0x4] sm:$0xf] %vm169, %v166
  %172 = vst.msk [vmem:[%s5 + $0x8] sm:$0xf] %vm169, %v167
  %173 = vst.msk [vmem:[%s5 + $0xc] sm:$0xf] %vm169, %v168
  // Predicated region
  $region22: #{tpu_custom_call.1} parent=0 // pred_check
    _
  $region23: #{tpu_custom_call.1} parent=0 // pred_check_branch
    %175 = sbr.rel (0) target = $region25
  $region24: #{tpu_custom_call.1} parent=0 // pred_region
    _
  $region25: #{tpu_custom_call.1} parent=0 // pred_fallthru
    _
  // Predicated region
  $region26: #{tpu_custom_call.1} parent=0 // pred_check
    _
  $region27: #{tpu_custom_call.1} parent=0 // pred_check_branch
    %177 = sbr.rel (0) target = $region29
  $region28: #{tpu_custom_call.1} parent=0 // pred_region
    _
  $region29: #{tpu_custom_call.1} parent=0 // pred_fallthru
    _

</llo_original>
